<compile_context>
chip_gen: v7x
topology: tpu7x:2x2x1
jax: 0.10.0
libtpu: 0.0.40
codegen_flags: <defaults>
</compile_context>

<pallas_src>
import jax
import jax.numpy as jnp
from jax.experimental import pallas as pl
from jax.experimental.pallas import tpu as pltpu


def dqn_kernel(x1_ref, x2_ref, lens_ref, w_enc_ref, wq_ref, q_ref):
    D = x1_ref.shape[1]
    TB, S, E = x2_ref.shape
    H = w_enc_ref.shape[1]

    # Static sub-views of the two packed parameter blobs (zero-cost ref views).
    w1 = w_enc_ref[0:D, :]                             # [D, H]
    w2 = w_enc_ref[D:D + H, :]                         # [H, H]
    we = w_enc_ref[D + H:D + H + E, :]                 # [E, H]
    b1 = w_enc_ref[D + H + E:D + H + E + 1, :]         # [1, H]
    be = w_enc_ref[D + H + E + 1:D + H + E + 2, :]     # [1, H]
    wq1 = wq_ref[0:H, :]                               # [H, A_pad]
    wq2 = wq_ref[H:2 * H, :]                           # [H, A_pad]
    bq = wq_ref[2 * H:2 * H + 1, :]                    # [1, A_pad] (b2 folded in)

    # ---------------- encoder ----------------
    h = jnp.dot(x1_ref[...], w1, preferred_element_type=jnp.float32)     # [TB, H]
    h = jnp.maximum(h + b1, 0.0)
    h1 = jnp.dot(h, w2, preferred_element_type=jnp.float32)              # [TB, H]
    # (encoder's second bias b2 is folded into bq in the wrapper)

    # ---------------- decoder ----------------
    # masked mean-pool over S: VPU multiply + sublane reduce (XLU slot),
    # instead of TB independent 1xSxE GEMVs on the MXU.
    x2 = x2_ref[...]                                                      # [TB, S, E]
    lens = lens_ref[...]                                                  # [TB, 1] int32
    inv_len = 1.0 / jnp.maximum(lens, 1).astype(jnp.float32)              # [TB, 1]
    pos = jax.lax.broadcasted_iota(jnp.int32, (TB, S, E), 1)              # s index
    w3 = jnp.where(pos < lens[:, :, None], inv_len[:, :, None], 0.0)      # [TB, S, E]
    pooled = jnp.sum(x2 * w3, axis=1)                                     # [TB, E]

    h2 = jnp.dot(pooled, we, preferred_element_type=jnp.float32)          # [TB, H]
    h2 = jnp.maximum(h2 + be, 0.0)

    # head: two accumulating K=H dots (no [TB,128] concat relayout for H<128)
    q = jnp.dot(h1, wq1, preferred_element_type=jnp.float32)              # [TB, A_pad]
    q = q + jnp.dot(h2, wq2, preferred_element_type=jnp.float32)
    q_ref[...] = (q + bq).astype(q_ref.dtype)


def pack_params(params, A_pad):
    """Consolidate the raw parameter arrays into 2 packed blobs (plain JAX)."""
    H = params["w1"].shape[1]
    A = params["wq1"].shape[1]
    # encoder/decoder blob: [w1; w2; we; b1; be] along the fan-in axis
    w_enc = jnp.concatenate(
        [params["w1"], params["w2"], params["we"], params["b1"], params["be"]],
        axis=0)
    # head blob: [wq1; wq2; bq'] lane-padded to A_pad.
    # fold b2 into bq:  (h@w2 + b2)@wq1 == h@w2@wq1 + b2@wq1
    bq_eff = params["bq"] + params["b2"] @ params["wq1"]
    wq = jnp.concatenate([params["wq1"], params["wq2"], bq_eff], axis=0)
    wq_pad = jnp.zeros((2 * H + 1, A_pad), jnp.float32).at[:, :A].set(wq)
    return w_enc, wq_pad


def _default_block_b(B):
    """Generation-aware batch tile.

    v5e/v6e have 1 TensorCore -> the grid is a serial loop, so use a single
    grid step for small B.  v7x has 2 TCs -> keep >=2 parallel grid steps.
    For large B, cap the tile near the MXU row count (256).
    """
    try:
        kind = jax.devices()[0].device_kind.lower()
    except Exception:  # pragma: no cover - defensive
        kind = ""
    n_tc = 2 if ("v7" in kind or "7x" in kind) else 1
    tb = B
    if n_tc > 1 and B % n_tc == 0 and B >= n_tc:
        tb = B // n_tc
    # once the batch is large, shrink tiles toward MXU-sized blocks
    while tb > 256 and tb % 2 == 0:
        tb //= 2
    return tb


def dqn_forward(x1, x2, x2lens, params, *, block_b=None, return_padded=False):
    B, D = x1.shape
    _, S, E = x2.shape
    H = params["w1"].shape[1]
    A = params["wq1"].shape[1]
    A_pad = ((A + 127) // 128) * 128          # lane-dense output width

    w_enc, wq_pad = pack_params(params, A_pad)

    TB = _default_block_b(B) if block_b is None else block_b
    if B % TB != 0:
        TB = B                                 # fall back to a single grid step
    grid = (B // TB,)

    q_pad = pl.pallas_call(
        dqn_kernel,
        out_shape=jax.ShapeDtypeStruct((B, A_pad), jnp.float32),
        grid_spec=pltpu.PrefetchScalarGridSpec(
            num_scalar_prefetch=0,
            grid=grid,
            in_specs=[
                pl.BlockSpec((TB, D), lambda i: (i, 0)),              # x1     (tiled on B)
                pl.BlockSpec((TB, S, E), lambda i: (i, 0, 0)),        # x2     (tiled on B)
                pl.BlockSpec((TB, 1), lambda i: (i, 0)),              # x2lens (tiled on B)
                pl.BlockSpec((D + H + E + 2, H), lambda i: (0, 0)),   # [w1;w2;we;b1;be] resident
                pl.BlockSpec((2 * H + 1, A_pad), lambda i: (0, 0)),   # [wq1;wq2;bq']   resident
            ],
            out_specs=pl.BlockSpec((TB, A_pad), lambda i: (i, 0)),
        ),
        compiler_params=pltpu.CompilerParams(
            dimension_semantics=("parallel",),     # megacore shard on v7x
            vmem_limit_bytes=32 << 20,             # safe for v7x's 64 MiB VMEM
        ),
    )(x1, x2, x2lens, w_enc, wq_pad)

    if return_padded:
        return q_pad        # consumers that tolerate [B, A_pad] skip an XLA slice op
    return q_pad[:, :A]


def init_params(key, D, E, H, A):
    ks = jax.random.split(key, 8)

    def dense(k, fan_in, fan_out):
        return (jax.random.normal(k, (fan_in, fan_out), jnp.float32)
                * (1.0 / jnp.sqrt(fan_in)))

    return {
        "w1":  dense(ks[0], D, H), "b1": jnp.zeros((1, H), jnp.float32),
        "w2":  dense(ks[1], H, H), "b2": jnp.zeros((1, H), jnp.float32),
        "we":  dense(ks[2], E, H), "be": jnp.zeros((1, H), jnp.float32),
        "wq1": dense(ks[3], H, A),
        "wq2": dense(ks[4], H, A),
        "bq":  jnp.zeros((1, A), jnp.float32),
    }


def reference_forward(x1, x2, x2lens, p):
    """Pure-JAX reference for correctness checking."""
    h = jnp.maximum(x1 @ p["w1"] + p["b1"], 0.0)
    h1 = h @ p["w2"] + p["b2"]
    lens = x2lens.astype(jnp.float32)
    S = x2.shape[1]
    mask = (jnp.arange(S)[None, :] < lens).astype(jnp.float32)
    pooled = jnp.sum(x2 * mask[:, :, None], axis=1) / lens
    h2 = jnp.maximum(pooled @ p["we"] + p["be"], 0.0)
    return h1 @ p["wq1"] + h2 @ p["wq2"] + p["bq"]


if __name__ == "__main__":
    B, D, S, E, H, A = 16, 32, 8, 32, 64, 16

    key = jax.random.PRNGKey(0)
    k_x1, k_x2, k_len, k_p = jax.random.split(key, 4)

    x1 = jax.random.normal(k_x1, (B, D), jnp.float32)
    x2 = jax.random.normal(k_x2, (B, S, E), jnp.float32)
    # lens >= 1: the kernel guards the divide with max(len, 1); the reference
    # would produce NaN for len == 0, so that case is intentionally excluded.
    x2lens = jax.random.randint(k_len, (B, 1), 1, S + 1, jnp.int32)

    params = init_params(k_p, D, E, H, A)

    q = dqn_forward(x1, x2, x2lens, params)   # generation-aware batch tiling
    jax.block_until_ready(q)

    q_ref = reference_forward(x1, x2, x2lens, params)
    assert q.shape == (B, A)
    assert jnp.allclose(q, q_ref, atol=1e-4, rtol=1e-4)

    print("KERNEL_OK")
</pallas_src>

<mosaic_0001>
module attributes {stable_mosaic.version = 11 : i64} {
  func.func @dqn_kernel(%arg0: i32, %arg1: memref<16x32xf32, #tpu.memory_space<vmem>>, %arg2: memref<16x8x32xf32, #tpu.memory_space<vmem>>, %arg3: memref<16x1xi32, #tpu.memory_space<vmem>>, %arg4: memref<130x64xf32, #tpu.memory_space<vmem>>, %arg5: memref<129x128xf32, #tpu.memory_space<vmem>>, %arg6: memref<16x128xf32, #tpu.memory_space<vmem>>) attributes {dimension_semantics = [#tpu.dimension_semantics<parallel>], iteration_bounds = array<i64: 1>, scalar_prefetch = 0 : i64, scratch_operands = 0 : i64, tpu.core_type = #tpu.core_type<tc>, window_params = [{transform_indices = @transform_0, window_bounds = array<i64: 16, 32>}, {transform_indices = @transform_1, window_bounds = array<i64: 16, 8, 32>}, {transform_indices = @transform_2, window_bounds = array<i64: 16, 1>}, {pipeline_mode = #tpu.pipeline_mode<synchronous>, transform_indices = @transform_3, window_bounds = array<i64: 130, 64>}, {pipeline_mode = #tpu.pipeline_mode<synchronous>, transform_indices = @transform_4, window_bounds = array<i64: 129, 128>}, {transform_indices = @transform_5, window_bounds = array<i64: 16, 128>}]} {
    %c0 = arith.constant 0 : index
    %c0_0 = arith.constant 0 : index
    %0 = vector.load %arg4[%c0, %c0_0] : memref<130x64xf32, #tpu.memory_space<vmem>>, vector<32x64xf32>
    %c32 = arith.constant 32 : index
    %c0_1 = arith.constant 0 : index
    %1 = vector.load %arg4[%c32, %c0_1] : memref<130x64xf32, #tpu.memory_space<vmem>>, vector<64x64xf32>
    %c96 = arith.constant 96 : index
    %c0_2 = arith.constant 0 : index
    %2 = vector.load %arg4[%c96, %c0_2] : memref<130x64xf32, #tpu.memory_space<vmem>>, vector<32x64xf32>
    %c128 = arith.constant 128 : index
    %c0_3 = arith.constant 0 : index
    %3 = vector.load %arg4[%c128, %c0_3] : memref<130x64xf32, #tpu.memory_space<vmem>>, vector<1x64xf32>
    %c129 = arith.constant 129 : index
    %c0_4 = arith.constant 0 : index
    %4 = vector.load %arg4[%c129, %c0_4] : memref<130x64xf32, #tpu.memory_space<vmem>>, vector<1x64xf32>
    %c0_5 = arith.constant 0 : index
    %c0_6 = arith.constant 0 : index
    %5 = vector.load %arg5[%c0_5, %c0_6] : memref<129x128xf32, #tpu.memory_space<vmem>>, vector<64x128xf32>
    %c64 = arith.constant 64 : index
    %c0_7 = arith.constant 0 : index
    %6 = vector.load %arg5[%c64, %c0_7] : memref<129x128xf32, #tpu.memory_space<vmem>>, vector<64x128xf32>
    %c128_8 = arith.constant 128 : index
    %c0_9 = arith.constant 0 : index
    %7 = vector.load %arg5[%c128_8, %c0_9] : memref<129x128xf32, #tpu.memory_space<vmem>>, vector<1x128xf32>
    %c0_10 = arith.constant 0 : index
    %c0_11 = arith.constant 0 : index
    %8 = vector.load %arg1[%c0_10, %c0_11] : memref<16x32xf32, #tpu.memory_space<vmem>>, vector<16x32xf32>
    %cst = arith.constant dense<0.000000e+00> : vector<16x64xf32>
    %9 = tpu.matmul %8, %0, %cst {dimension_numbers = #tpu.dot_dimension_numbers<[1], [0], [0], [1], [0, 0, 1, 1], [], []>} : vector<16x32xf32>, vector<32x64xf32>, vector<16x64xf32> -> vector<16x64xf32>
    %10 = vector.broadcast %3 : vector<1x64xf32> to vector<16x64xf32>
    %11 = arith.addf %9, %10 : vector<16x64xf32>
    %cst_12 = arith.constant 0.000000e+00 : f32
    %12 = vector.broadcast %cst_12 : f32 to vector<16x64xf32>
    %13 = arith.maximumf %11, %12 : vector<16x64xf32>
    %cst_13 = arith.constant dense<0.000000e+00> : vector<16x64xf32>
    %14 = tpu.matmul %13, %1, %cst_13 {dimension_numbers = #tpu.dot_dimension_numbers<[1], [0], [0], [1], [0, 0, 1, 1], [], []>} : vector<16x64xf32>, vector<64x64xf32>, vector<16x64xf32> -> vector<16x64xf32>
    %c0_14 = arith.constant 0 : index
    %c0_15 = arith.constant 0 : index
    %c0_16 = arith.constant 0 : index
    %15 = vector.load %arg2[%c0_14, %c0_15, %c0_16] : memref<16x8x32xf32, #tpu.memory_space<vmem>>, vector<16x8x32xf32>
    %c0_17 = arith.constant 0 : index
    %c0_18 = arith.constant 0 : index
    %16 = vector.load %arg3[%c0_17, %c0_18] : memref<16x1xi32, #tpu.memory_space<vmem>>, vector<16x1xi32>
    %c1_i32 = arith.constant 1 : i32
    %17 = vector.broadcast %c1_i32 : i32 to vector<16x1xi32>
    %18 = arith.maxsi %16, %17 : vector<16x1xi32>
    %19 = arith.sitofp %18 : vector<16x1xi32> to vector<16x1xf32>
    %cst_19 = arith.constant 1.000000e+00 : f32
    %20 = vector.broadcast %cst_19 : f32 to vector<16x1xf32>
    %21 = arith.divf %20, %19 : vector<16x1xf32>
    %22 = tpu.iota {dimensions = array<i32: 1>} : vector<16x8x32xi32>
    %23 = vector.shape_cast %16 : vector<16x1xi32> to vector<16x1x1xi32>
    %24 = vector.broadcast %23 : vector<16x1x1xi32> to vector<16x8x32xi32>
    %25 = arith.cmpi slt, %22, %24 : vector<16x8x32xi32>
    %26 = vector.shape_cast %21 : vector<16x1xf32> to vector<16x1x1xf32>
    %cst_20 = arith.constant 0.000000e+00 : f32
    %27 = vector.shape_cast %26 : vector<16x1x1xf32> to vector<16x1x1xf32>
    %28 = vector.broadcast %27 : vector<16x1x1xf32> to vector<16x8x32xf32>
    %29 = vector.broadcast %cst_20 : f32 to vector<16x8x32xf32>
    %30 = arith.select %25, %28, %29 : vector<16x8x32xi1>, vector<16x8x32xf32>
    %31 = arith.mulf %15, %30 : vector<16x8x32xf32>
    %cst_21 = arith.constant dense<0.000000e+00> : vector<16x32xf32>
    %32 = vector.multi_reduction <add>, %31, %cst_21 [1] : vector<16x8x32xf32> to vector<16x32xf32>
    %cst_22 = arith.constant dense<0.000000e+00> : vector<16x64xf32>
    %33 = tpu.matmul %32, %2, %cst_22 {dimension_numbers = #tpu.dot_dimension_numbers<[1], [0], [0], [1], [0, 0, 1, 1], [], []>} : vector<16x32xf32>, vector<32x64xf32>, vector<16x64xf32> -> vector<16x64xf32>
    %34 = vector.broadcast %4 : vector<1x64xf32> to vector<16x64xf32>
    %35 = arith.addf %33, %34 : vector<16x64xf32>
    %cst_23 = arith.constant 0.000000e+00 : f32
    %36 = vector.broadcast %cst_23 : f32 to vector<16x64xf32>
    %37 = arith.maximumf %35, %36 : vector<16x64xf32>
    %cst_24 = arith.constant dense<0.000000e+00> : vector<16x128xf32>
    %38 = tpu.matmul %14, %5, %cst_24 {dimension_numbers = #tpu.dot_dimension_numbers<[1], [0], [0], [1], [0, 0, 1, 1], [], []>} : vector<16x64xf32>, vector<64x128xf32>, vector<16x128xf32> -> vector<16x128xf32>
    %cst_25 = arith.constant dense<0.000000e+00> : vector<16x128xf32>
    %39 = tpu.matmul %37, %6, %cst_25 {dimension_numbers = #tpu.dot_dimension_numbers<[1], [0], [0], [1], [0, 0, 1, 1], [], []>} : vector<16x64xf32>, vector<64x128xf32>, vector<16x128xf32> -> vector<16x128xf32>
    %40 = arith.addf %38, %39 : vector<16x128xf32>
    %41 = vector.broadcast %7 : vector<1x128xf32> to vector<16x128xf32>
    %42 = arith.addf %40, %41 : vector<16x128xf32>
    %c0_26 = arith.constant 0 : index
    %c0_27 = arith.constant 0 : index
    %43 = vector.load %arg6[%c0_26, %c0_27] : memref<16x128xf32, #tpu.memory_space<vmem>>, vector<16x128xf32>
    tpu.vector_store %arg6[%c0_26, %c0_27], %42 {strides = array<i32>} : memref<16x128xf32, #tpu.memory_space<vmem>>, vector<16x128xf32>,
    return
  }
  func.func @transform_0(%arg0: i32) -> (i32, i32) {
    %c0_i32 = arith.constant 0 : i32
    %c0_i32_0 = arith.constant 0 : i32
    return %arg0, %c0_i32 : i32, i32
  }
  func.func @transform_1(%arg0: i32) -> (i32, i32, i32) {
    %c0_i32 = arith.constant 0 : i32
    %c0_i32_0 = arith.constant 0 : i32
    %c0_i32_1 = arith.constant 0 : i32
    return %arg0, %c0_i32, %c0_i32_0 : i32, i32, i32
  }
  func.func @transform_2(%arg0: i32) -> (i32, i32) {
    %c0_i32 = arith.constant 0 : i32
    %c0_i32_0 = arith.constant 0 : i32
    return %arg0, %c0_i32 : i32, i32
  }
  func.func @transform_3(%arg0: i32) -> (i32, i32) {
    %c0_i32 = arith.constant 0 : i32
    %c0_i32_0 = arith.constant 0 : i32
    %c0_i32_1 = arith.constant 0 : i32
    return %c0_i32, %c0_i32_0 : i32, i32
  }
  func.func @transform_4(%arg0: i32) -> (i32, i32) {
    %c0_i32 = arith.constant 0 : i32
    %c0_i32_0 = arith.constant 0 : i32
    %c0_i32_1 = arith.constant 0 : i32
    return %c0_i32, %c0_i32_0 : i32, i32
  }
  func.func @transform_5(%arg0: i32) -> (i32, i32) {
    %c0_i32 = arith.constant 0 : i32
    %c0_i32_0 = arith.constant 0 : i32
    return %arg0, %c0_i32 : i32, i32
  }
}

</mosaic_0001>

<llo_original>
// kernel: tpu_custom_call.1
$region0: #{tpu_custom_call.1}
  #allocation0 [shape = 'u32[]', space=smem, size = 0x4, offset = 0x4, fixed_abs, tag = 'smem constant byte address 0x4 - core index']
  #allocation1 [shape = 'u32[144,128]{1,0:T(1,128)}', space=vmem, size = 0x12000, scoped, tag = 'internal scratch']
  %s0 = inlined_call_operand.vmem [shape: f32[16,32], index: 0, kind: input, shape index: {}]
  %s1 = inlined_call_operand.vmem [shape: f32[16,8,32], index: 1, kind: input, shape index: {}]
  %s2 = inlined_call_operand.vmem [shape: s32[16,1], index: 2, kind: input, shape index: {}]
  %s3 = inlined_call_operand.vmem [shape: f32[130,64], index: 3, kind: input, shape index: {}]
  %s4 = inlined_call_operand.vmem [shape: f32[129,128], index: 4, kind: input, shape index: {}]
  %s5 = inlined_call_operand.hbm [shape: f32[16,128], index: 5, kind: output, shape index: {}]
  %s6 = sld [smem:[#allocation0]]
  $region30: #{tpu_custom_call.1} parent=0
    _
  %s8 = ssub.s32 1, %s6
  %s9 = scalar_select 0, %s8, %s6
  $region1: #{tpu_custom_call.1} parent=0
    #allocation2 [shape = 'u8[8192]{0}', space=vmem, size = 0x2000, scoped, tag = 'output window, operand 0, single buffered']
    #allocation3 [shape = 's32[1]{0}', space=sflag, size = 0x4, scoped, tag = 'scoped memory for tpu_custom_call.1']
    %10 = vsyncpa [#allocation3], 0
    // Predicated region
    $region2: #{tpu_custom_call.1} parent=1 // pred_check
      _
    $region3: #{tpu_custom_call.1} parent=1 // pred_check_branch
      %12 = sbr.rel (0) target = $region5
    $region4: #{tpu_custom_call.1} parent=1 // pred_region
      _
    $region5: #{tpu_custom_call.1} parent=1 // pred_fallthru
      _
    // Predicated region
    $region6: #{tpu_custom_call.1} parent=1 // pred_check
      _
    $region7: #{tpu_custom_call.1} parent=1 // pred_check_branch
      %14 = sbr.rel (0) target = $region9
    $region8: #{tpu_custom_call.1} parent=1 // pred_region
      _
    $region9: #{tpu_custom_call.1} parent=1 // pred_fallthru
      _
    // Predicated region
    $region10: #{tpu_custom_call.1} parent=1 // pred_check
      _
    $region11: #{tpu_custom_call.1} parent=1 // pred_check_branch
      %16 = sbr.rel (0) target = $region13
    $region12: #{tpu_custom_call.1} parent=1 // pred_region
      _
    $region13: #{tpu_custom_call.1} parent=1 // pred_fallthru
      _
    // Predicated region
    $region14: #{tpu_custom_call.1} parent=1 // pred_check
      _
    $region15: #{tpu_custom_call.1} parent=1 // pred_check_branch
      %18 = sbr.rel (0) target = $region17
    $region16: #{tpu_custom_call.1} parent=1 // pred_region
      _
    $region17: #{tpu_custom_call.1} parent=1 // pred_fallthru
      _
    // Predicated region
    $region18: #{tpu_custom_call.1} parent=1 // pred_check
      _
    $region19: #{tpu_custom_call.1} parent=1 // pred_check_branch
      %20 = sbr.rel (0) target = $region21
    $region20: #{tpu_custom_call.1} parent=1 // pred_region
      _
    $region21: #{tpu_custom_call.1} parent=1 // pred_fallthru
      _
    %v21 = vld [vmem:[%s3] sm:$0xff]
    %v22 = vld [vmem:[%s3 + $0x8] sm:$0xff]
    %v23 = vld [vmem:[%s3 + $0x10] sm:$0xff]
    %v24 = vld [vmem:[%s3 + $0x18] sm:$0xff]
    %v25 = vld [vmem:[%s3 + $0x20] sm:$0xff]
    %v26 = vld [vmem:[%s3 + $0x28] sm:$0xff]
    %v27 = vld [vmem:[%s3 + $0x30] sm:$0xff]
    %v28 = vld [vmem:[%s3 + $0x38] sm:$0xff]
    %v29 = vld [vmem:[%s3 + $0x40] sm:$0xff]
    %v30 = vld [vmem:[%s3 + $0x48] sm:$0xff]
    %v31 = vld [vmem:[%s3 + $0x50] sm:$0xff]
    %v32 = vld [vmem:[%s3 + $0x58] sm:$0xff]
    %v33 = vld [vmem:[%s3 + $0x60] sm:$0xff]
    %v34 = vld [vmem:[%s3 + $0x68] sm:$0xff]
    %v35 = vld [vmem:[%s3 + $0x70] sm:$0xff]
    %v36 = vld [vmem:[%s3 + $0x78] sm:$0xff]
    %v37 = vld [vmem:[%s3 + $0x80] sm:$0x1]
    %v38 = vld [vmem:[%s3 + $0x81] sm:$0x1]
    %v39 = vld [vmem:[%s4] sm:$0xff]
    %v40 = vld [vmem:[%s4 + $0x8] sm:$0xff]
    %v41 = vld [vmem:[%s4 + $0x10] sm:$0xff]
    %v42 = vld [vmem:[%s4 + $0x18] sm:$0xff]
    %v43 = vld [vmem:[%s4 + $0x20] sm:$0xff]
    %v44 = vld [vmem:[%s4 + $0x28] sm:$0xff]
    %v45 = vld [vmem:[%s4 + $0x30] sm:$0xff]
    %v46 = vld [vmem:[%s4 + $0x38] sm:$0xff]
    %v47 = vld [vmem:[%s4 + $0x40] sm:$0xff]
    %v48 = vld [vmem:[%s4 + $0x48] sm:$0xff]
    %v49 = vld [vmem:[%s4 + $0x50] sm:$0xff]
    %v50 = vld [vmem:[%s4 + $0x58] sm:$0xff]
    %v51 = vld [vmem:[%s4 + $0x60] sm:$0xff]
    %v52 = vld [vmem:[%s4 + $0x68] sm:$0xff]
    %v53 = vld [vmem:[%s4 + $0x70] sm:$0xff]
    %v54 = vld [vmem:[%s4 + $0x78] sm:$0xff]
    %v55 = vld [vmem:[%s4 + $0x80] sm:$0x1]
    %v56 = vld [vmem:[%s0] sm:$0xff]
    %v57 = vld [vmem:[%s0 + $0x8] sm:$0xff]
    %v58 = vlaneseq
    %v59 = vshrl.u32 %v58, 7
    %v60 = vsub.s32 0, %v59
    %v61 = vrot.slane %v37, %v60
    %vm62 = vcmask 261120
    %v64 = vsel %vm62, %v56, 0
    %v67 = vsel %vm62, %v57, 0
    %69 = vmatprep.subr.mxu0 0.0
    %70 = vmatpush1.msra.mxu0 %v21
    %71 = vmatprep.subr.mxu0 0.0
    %72 = vmatpush1.msra.mxu0 %v22
    %73 = vmatprep.subr.mxu0 0.0
    %74 = vmatpush1.msra.mxu0 %v23
    %75 = vmatprep.subr.mxu0 0.0
    %76 = vmatpush1.msra.mxu0 %v24
    %77 = vmatprep.subr.mxu0 0.0
    %78 = vmatpush1.msra.mxu0 0.0
    %79 = vmatprep.subr.mxu0 0.0
    %80 = vmatpush1.msra.mxu0 0.0
    %81 = vmatprep.subr.mxu0 0.0
    %82 = vmatpush1.msra.mxu0 0.0
    %83 = vmatprep.subr.mxu0 0.0
    %84 = vmatpush1.msra.mxu0 0.0
    %85 = vmatprep.subr.mxu0 0.0
    %86 = vmatpush1.msra.mxu0 0.0
    %87 = vmatprep.subr.mxu0 0.0
    %88 = vmatpush1.msra.mxu0 0.0
    %89 = vmatprep.subr.mxu0 0.0
    %90 = vmatpush1.msra.mxu0 0.0
    %91 = vmatprep.subr.mxu0 0.0
    %92 = vmatpush1.msra.mxu0 0.0
    %93 = vmatprep.subr.mxu0 0.0
    %94 = vmatpush1.msra.mxu0 0.0
    %95 = vmatprep.subr.mxu0 0.0
    %96 = vmatpush1.msra.mxu0 0.0
    %97 = vmatprep.subr.mxu0 0.0
    %98 = vmatpush1.msra.mxu0 0.0
    %99 = vmatprep.subr.mxu0 0.0
    %100 = vmatpush1.msra.mxu0 0.0
    %101 = vmatprep.subr.mxu0 0.0
    %102 = vmatpush1.msra.mxu0 0.0
    %103 = vmatprep.subr.mxu0 0.0
    %104 = vmatpush1.msra.mxu0 0.0
    %105 = vmatprep.subr.mxu0 0.0
    %106 = vmatpush1.msra.mxu0 0.0
    %107 = vmatprep.subr.mxu0 0.0
    %108 = vmatpush1.msra.mxu0 0.0
    %109 = vmatprep.subr.mxu0 0.0
    %110 = vmatpush1.msra.mxu0 0.0
    %111 = vmatprep.subr.mxu0 0.0
    %112 = vmatpush1.msra.mxu0 0.0
    %113 = vmatprep.subr.mxu0 0.0
    %114 = vmatpush1.msra.mxu0 0.0
    %115 = vmatprep.subr.mxu0 0.0
    %116 = vmatpush1.msra.mxu0 0.0
    %117 = vmatprep.subr.mxu0 0.0
    %118 = vmatpush1.msra.mxu0 0.0
    %119 = vmatprep.subr.mxu0 0.0
    %120 = vmatpush1.msra.mxu0 0.0
    %121 = vmatprep.subr.mxu0 0.0
    %122 = vmatpush1.msra.mxu0 0.0
    %123 = vmatprep.subr.mxu0 0.0
    %124 = vmatpush1.msra.mxu0 0.0
    %125 = vmatprep.subr.mxu0 0.0
    %126 = vmatpush1.msra.mxu0 0.0
    %127 = vmatprep.subr.mxu0 0.0
    %128 = vmatpush1.msra.mxu0 0.0
    %129 = vmatprep.subr.mxu0 0.0
    %130 = vmatpush1.msra.mxu0 0.0
    %131 = vmatprep.subr.mxu0 0.0
    %132 = vmatpush1.msra.mxu0 0.0
    %133 = vmatprep.mubr.f32.mxu0 0.0
    %134 = vmatmul.mubr.f32.gmra.mrb[0].mxu0 %v64
    %v135 = vpop.f32.mrb[0].mxu0
    %v136 = vadd.f32 %v61, %v135
    %v137 = vpop.f32.mrb[0].mxu0
    %138 = vmatprep.mubr.f32.mxu0 0.0
    %139 = vmatmul.mubr.f32.gmra.mrb[0].mxu0 %v67
    %v140 = vpop.f32.mrb[0].mxu0
    %v141 = vadd.f32 %v61, %v140
    %v142 = vpop.f32.mrb[0].mxu0
    %143 = vdwg.mxu0
    %v144 = vmax.f32 %v136, 0.0
    %v145 = vmax.f32 %v141, 0.0
    %vm146 = vcmask 523264
    %v148 = vsel %vm146, %v144, 0
    %v151 = vsel %vm146, %v145, 0
    %153 = vmatprep.subr.mxu0 0.0
    %154 = vmatpush1.msra.mxu0 %v25
    %155 = vmatprep.subr.mxu0 0.0
    %156 = vmatpush1.msra.mxu0 %v26
    %157 = vmatprep.subr.mxu0 0.0
    %158 = vmatpush1.msra.mxu0 %v27
    %159 = vmatprep.subr.mxu0 0.0
    %160 = vmatpush1.msra.mxu0 %v28
    %161 = vmatprep.subr.mxu0 0.0
    %162 = vmatpush1.msra.mxu0 %v29
    %163 = vmatprep.subr.mxu0 0.0
    %164 = vmatpush1.msra.mxu0 %v30
    %165 = vmatprep.subr.mxu0 0.0
    %166 = vmatpush1.msra.mxu0 %v31
    %167 = vmatprep.subr.mxu0 0.0
    %168 = vmatpush1.msra.mxu0 %v32
    %169 = vmatprep.subr.mxu0 0.0
    %170 = vmatpush1.msra.mxu0 0.0
    %171 = vmatprep.subr.mxu0 0.0
    %172 = vmatpush1.msra.mxu0 0.0
    %173 = vmatprep.subr.mxu0 0.0
    %174 = vmatpush1.msra.mxu0 0.0
    %175 = vmatprep.subr.mxu0 0.0
    %176 = vmatpush1.msra.mxu0 0.0
    %177 = vmatprep.subr.mxu0 0.0
    %178 = vmatpush1.msra.mxu0 0.0
    %179 = vmatprep.subr.mxu0 0.0
    %180 = vmatpush1.msra.mxu0 0.0
    %181 = vmatprep.subr.mxu0 0.0
    %182 = vmatpush1.msra.mxu0 0.0
    %183 = vmatprep.subr.mxu0 0.0
    %184 = vmatpush1.msra.mxu0 0.0
    %185 = vmatprep.subr.mxu0 0.0
    %186 = vmatpush1.msra.mxu0 0.0
    %187 = vmatprep.subr.mxu0 0.0
    %188 = vmatpush1.msra.mxu0 0.0
    %189 = vmatprep.subr.mxu0 0.0
    %190 = vmatpush1.msra.mxu0 0.0
    %191 = vmatprep.subr.mxu0 0.0
    %192 = vmatpush1.msra.mxu0 0.0
    %193 = vmatprep.subr.mxu0 0.0
    %194 = vmatpush1.msra.mxu0 0.0
    %195 = vmatprep.subr.mxu0 0.0
    %196 = vmatpush1.msra.mxu0 0.0
    %197 = vmatprep.subr.mxu0 0.0
    %198 = vmatpush1.msra.mxu0 0.0
    %199 = vmatprep.subr.mxu0 0.0
    %200 = vmatpush1.msra.mxu0 0.0
    %201 = vmatprep.subr.mxu0 0.0
    %202 = vmatpush1.msra.mxu0 0.0
    %203 = vmatprep.subr.mxu0 0.0
    %204 = vmatpush1.msra.mxu0 0.0
    %205 = vmatprep.subr.mxu0 0.0
    %206 = vmatpush1.msra.mxu0 0.0
    %207 = vmatprep.subr.mxu0 0.0
    %208 = vmatpush1.msra.mxu0 0.0
    %209 = vmatprep.subr.mxu0 0.0
    %210 = vmatpush1.msra.mxu0 0.0
    %211 = vmatprep.subr.mxu0 0.0
    %212 = vmatpush1.msra.mxu0 0.0
    %213 = vmatprep.subr.mxu0 0.0
    %214 = vmatpush1.msra.mxu0 0.0
    %215 = vmatprep.subr.mxu0 0.0
    %216 = vmatpush1.msra.mxu0 0.0
    %217 = vmatprep.mubr.f32.mxu0 0.0
    %218 = vmatmul.mubr.f32.gmra.mrb[0].mxu0 %v148
    %v219 = vpop.f32.mrb[0].mxu0
    %v220 = vadd.f32 0.0, %v219
    %v221 = vpop.f32.mrb[0].mxu0
    %222 = vmatprep.mubr.f32.mxu0 0.0
    %223 = vmatmul.mubr.f32.gmra.mrb[0].mxu0 %v151
    %v224 = vpop.f32.mrb[0].mxu0
    %v225 = vadd.f32 0.0, %v224
    %v226 = vpop.f32.mrb[0].mxu0
    %227 = vdwg.mxu0
    %v228 = vld [vmem:[%s1] sm:$0xff]
    %v229 = vld [vmem:[%s1 + $0x8] sm:$0xff]
    %v230 = vld [vmem:[%s1 + $0x10] sm:$0xff]
    %v231 = vld [vmem:[%s1 + $0x18] sm:$0xff]
    %v232 = vld [vmem:[%s1 + $0x20] sm:$0xff]
    %v233 = vld [vmem:[%s1 + $0x28] sm:$0xff]
    %v234 = vld [vmem:[%s1 + $0x30] sm:$0xff]
    %v235 = vld [vmem:[%s1 + $0x38] sm:$0xff]
    %v236 = vld [vmem:[%s1 + $0x40] sm:$0xff]
    %v237 = vld [vmem:[%s1 + $0x48] sm:$0xff]
    %v238 = vld [vmem:[%s1 + $0x50] sm:$0xff]
    %v239 = vld [vmem:[%s1 + $0x58] sm:$0xff]
    %v240 = vld [vmem:[%s1 + $0x60] sm:$0xff]
    %v241 = vld [vmem:[%s1 + $0x68] sm:$0xff]
    %v242 = vld [vmem:[%s1 + $0x70] sm:$0xff]
    %v243 = vld [vmem:[%s1 + $0x78] sm:$0xff]
    %v244 = vld [vmem:[%s2] sm:$0xff]
    %v245 = vld [vmem:[%s2 + $0x8] sm:$0xff]
    %vm246 = vcmp.gt.s32.totalorder %v244, 1
    %v247 = vsel %vm246, %v244, 1
    %vm248 = vcmp.gt.s32.totalorder %v245, 1
    %v249 = vsel %vm248, %v245, 1
    %v250 = vcvt.s32.f32 %v247
    %v251 = vcvt.s32.f32 %v249
    %v252 = vrcp.pop %v250
    %v253 = vmul.f32 1.0, %v252
    %v254 = vrcp.pop %v251
    %v255 = vmul.f32 1.0, %v254
    %v256 = vlaneseq
    %v257 = vshrl.u32 %v256, 7
    %v258 = vcombine.high %v244, %v244
    %v260 = vunpack.c.l.s4 1966171168
    %v261 = vunpack.c.0.s8 %v260
    %v262 = vlaneseq
    %v263 = vshrl.u32 %v262, 7
    %v264 = vsub.s32 %v261, %v263
    %v265 = vrot.slane %v244, %v264
    %v267 = vunpack.c.l.s4 1966171168
    %v268 = vunpack.c.0.s8 %v267
    %v269 = vlaneseq
    %v270 = vshrl.u32 %v269, 7
    %v271 = vsub.s32 %v268, %v270
    %v272 = vrot.slane %v258, %v271
    %v273 = vcombine.high %v265, %v265
    %v274 = vcombine.high %v272, %v272
    %v276 = vunpack.c.l.s4 1966171168
    %v277 = vunpack.c.0.s8 %v276
    %v278 = vlaneseq
    %v279 = vshrl.u32 %v278, 7
    %v280 = vsub.s32 %v277, %v279
    %v281 = vrot.slane %v265, %v280
    %v283 = vunpack.c.l.s4 1966171168
    %v284 = vunpack.c.0.s8 %v283
    %v285 = vlaneseq
    %v286 = vshrl.u32 %v285, 7
    %v287 = vsub.s32 %v284, %v286
    %v288 = vrot.slane %v272, %v287
    %v290 = vunpack.c.l.s4 1966171168
    %v291 = vunpack.c.0.s8 %v290
    %v292 = vlaneseq
    %v293 = vshrl.u32 %v292, 7
    %v294 = vsub.s32 %v291, %v293
    %v295 = vrot.slane %v273, %v294
    %v297 = vunpack.c.l.s4 1966171168
    %v298 = vunpack.c.0.s8 %v297
    %v299 = vlaneseq
    %v300 = vshrl.u32 %v299, 7
    %v301 = vsub.s32 %v298, %v300
    %v302 = vrot.slane %v274, %v301
    %v303 = vcombine.high %v281, %v281
    %v304 = vcombine.high %v288, %v288
    %v305 = vcombine.high %v295, %v295
    %v306 = vcombine.high %v302, %v302
    %v307 = vcombine.high %v245, %v245
    %v309 = vunpack.c.l.s4 1966171168
    %v310 = vunpack.c.0.s8 %v309
    %v311 = vlaneseq
    %v312 = vshrl.u32 %v311, 7
    %v313 = vsub.s32 %v310, %v312
    %v314 = vrot.slane %v245, %v313
    %v316 = vunpack.c.l.s4 1966171168
    %v317 = vunpack.c.0.s8 %v316
    %v318 = vlaneseq
    %v319 = vshrl.u32 %v318, 7
    %v320 = vsub.s32 %v317, %v319
    %v321 = vrot.slane %v307, %v320
    %v322 = vcombine.high %v314, %v314
    %v323 = vcombine.high %v321, %v321
    %v325 = vunpack.c.l.s4 1966171168
    %v326 = vunpack.c.0.s8 %v325
    %v327 = vlaneseq
    %v328 = vshrl.u32 %v327, 7
    %v329 = vsub.s32 %v326, %v328
    %v330 = vrot.slane %v314, %v329
    %v332 = vunpack.c.l.s4 1966171168
    %v333 = vunpack.c.0.s8 %v332
    %v334 = vlaneseq
    %v335 = vshrl.u32 %v334, 7
    %v336 = vsub.s32 %v333, %v335
    %v337 = vrot.slane %v321, %v336
    %v339 = vunpack.c.l.s4 1966171168
    %v340 = vunpack.c.0.s8 %v339
    %v341 = vlaneseq
    %v342 = vshrl.u32 %v341, 7
    %v343 = vsub.s32 %v340, %v342
    %v344 = vrot.slane %v322, %v343
    %v346 = vunpack.c.l.s4 1966171168
    %v347 = vunpack.c.0.s8 %v346
    %v348 = vlaneseq
    %v349 = vshrl.u32 %v348, 7
    %v350 = vsub.s32 %v347, %v349
    %v351 = vrot.slane %v323, %v350
    %v352 = vcombine.high %v330, %v330
    %v353 = vcombine.high %v337, %v337
    %v354 = vcombine.high %v344, %v344
    %v355 = vcombine.high %v351, %v351
    %v356 = vlaneseq
    %v357 = vshrl.u32 %v356, 7
    %v358 = vsub.s32 0, %v357
    %v359 = vrot.slane %v281, %v358
    %v360 = vlaneseq
    %v361 = vshrl.u32 %v360, 7
    %v362 = vsub.s32 0, %v361
    %v363 = vrot.slane %v295, %v362
    %v364 = vlaneseq
    %v365 = vshrl.u32 %v364, 7
    %v366 = vsub.s32 0, %v365
    %v367 = vrot.slane %v303, %v366
    %v368 = vlaneseq
    %v369 = vshrl.u32 %v368, 7
    %v370 = vsub.s32 0, %v369
    %v371 = vrot.slane %v305, %v370
    %v372 = vlaneseq
    %v373 = vshrl.u32 %v372, 7
    %v374 = vsub.s32 0, %v373
    %v375 = vrot.slane %v288, %v374
    %v376 = vlaneseq
    %v377 = vshrl.u32 %v376, 7
    %v378 = vsub.s32 0, %v377
    %v379 = vrot.slane %v302, %v378
    %v380 = vlaneseq
    %v381 = vshrl.u32 %v380, 7
    %v382 = vsub.s32 0, %v381
    %v383 = vrot.slane %v304, %v382
    %v384 = vlaneseq
    %v385 = vshrl.u32 %v384, 7
    %v386 = vsub.s32 0, %v385
    %v387 = vrot.slane %v306, %v386
    %v388 = vlaneseq
    %v389 = vshrl.u32 %v388, 7
    %v390 = vsub.s32 0, %v389
    %v391 = vrot.slane %v330, %v390
    %v392 = vlaneseq
    %v393 = vshrl.u32 %v392, 7
    %v394 = vsub.s32 0, %v393
    %v395 = vrot.slane %v344, %v394
    %v396 = vlaneseq
    %v397 = vshrl.u32 %v396, 7
    %v398 = vsub.s32 0, %v397
    %v399 = vrot.slane %v352, %v398
    %v400 = vlaneseq
    %v401 = vshrl.u32 %v400, 7
    %v402 = vsub.s32 0, %v401
    %v403 = vrot.slane %v354, %v402
    %v404 = vlaneseq
    %v405 = vshrl.u32 %v404, 7
    %v406 = vsub.s32 0, %v405
    %v407 = vrot.slane %v337, %v406
    %v408 = vlaneseq
    %v409 = vshrl.u32 %v408, 7
    %v410 = vsub.s32 0, %v409
    %v411 = vrot.slane %v351, %v410
    %v412 = vlaneseq
    %v413 = vshrl.u32 %v412, 7
    %v414 = vsub.s32 0, %v413
    %v415 = vrot.slane %v353, %v414
    %v416 = vlaneseq
    %v417 = vshrl.u32 %v416, 7
    %v418 = vsub.s32 0, %v417
    %v419 = vrot.slane %v355, %v418
    %420 = vset.pattern.permute.xlu0 0
    %421 = vperm.xlu0 %420, %v359
    %v422 = vpop.permute.xlu0 %421
    %423 = vset.pattern.permute.xlu0 0
    %424 = vperm.xlu0 %423, %v363
    %v425 = vpop.permute.xlu0 %424
    %426 = vset.pattern.permute.xlu0 0
    %427 = vperm.xlu0 %426, %v367
    %v428 = vpop.permute.xlu0 %427
    %429 = vset.pattern.permute.xlu0 0
    %430 = vperm.xlu0 %429, %v371
    %v431 = vpop.permute.xlu0 %430
    %432 = vset.pattern.permute.xlu0 0
    %433 = vperm.xlu0 %432, %v375
    %v434 = vpop.permute.xlu0 %433
    %435 = vset.pattern.permute.xlu0 0
    %436 = vperm.xlu0 %435, %v379
    %v437 = vpop.permute.xlu0 %436
    %438 = vset.pattern.permute.xlu0 0
    %439 = vperm.xlu0 %438, %v383
    %v440 = vpop.permute.xlu0 %439
    %441 = vset.pattern.permute.xlu0 0
    %442 = vperm.xlu0 %441, %v387
    %v443 = vpop.permute.xlu0 %442
    %444 = vset.pattern.permute.xlu0 0
    %445 = vperm.xlu0 %444, %v391
    %v446 = vpop.permute.xlu0 %445
    %447 = vset.pattern.permute.xlu0 0
    %448 = vperm.xlu0 %447, %v395
    %v449 = vpop.permute.xlu0 %448
    %450 = vset.pattern.permute.xlu0 0
    %451 = vperm.xlu0 %450, %v399
    %v452 = vpop.permute.xlu0 %451
    %453 = vset.pattern.permute.xlu0 0
    %454 = vperm.xlu0 %453, %v403
    %v455 = vpop.permute.xlu0 %454
    %456 = vset.pattern.permute.xlu0 0
    %457 = vperm.xlu0 %456, %v407
    %v458 = vpop.permute.xlu0 %457
    %459 = vset.pattern.permute.xlu0 0
    %460 = vperm.xlu0 %459, %v411
    %v461 = vpop.permute.xlu0 %460
    %462 = vset.pattern.permute.xlu0 0
    %463 = vperm.xlu0 %462, %v415
    %v464 = vpop.permute.xlu0 %463
    %465 = vset.pattern.permute.xlu0 0
    %466 = vperm.xlu0 %465, %v419
    %v467 = vpop.permute.xlu0 %466
    %vm468 = vcmp.lt.s32.totalorder %v257, %v422
    %vm469 = vcmp.lt.s32.totalorder %v257, %v425
    %vm470 = vcmp.lt.s32.totalorder %v257, %v428
    %vm471 = vcmp.lt.s32.totalorder %v257, %v431
    %vm472 = vcmp.lt.s32.totalorder %v257, %v434
    %vm473 = vcmp.lt.s32.totalorder %v257, %v437
    %vm474 = vcmp.lt.s32.totalorder %v257, %v440
    %vm475 = vcmp.lt.s32.totalorder %v257, %v443
    %vm476 = vcmp.lt.s32.totalorder %v257, %v446
    %vm477 = vcmp.lt.s32.totalorder %v257, %v449
    %vm478 = vcmp.lt.s32.totalorder %v257, %v452
    %vm479 = vcmp.lt.s32.totalorder %v257, %v455
    %vm480 = vcmp.lt.s32.totalorder %v257, %v458
    %vm481 = vcmp.lt.s32.totalorder %v257, %v461
    %vm482 = vcmp.lt.s32.totalorder %v257, %v464
    %vm483 = vcmp.lt.s32.totalorder %v257, %v467
    %v486 = vcombine.high %v253, %v253
    %v488 = vunpack.c.l.s4 1966171168
    %v489 = vunpack.c.0.s8 %v488
    %v490 = vlaneseq
    %v491 = vshrl.u32 %v490, 7
    %v492 = vsub.s32 %v489, %v491
    %v493 = vrot.slane %v253, %v492
    %v495 = vunpack.c.l.s4 1966171168
    %v496 = vunpack.c.0.s8 %v495
    %v497 = vlaneseq
    %v498 = vshrl.u32 %v497, 7
    %v499 = vsub.s32 %v496, %v498
    %v500 = vrot.slane %v486, %v499
    %v501 = vcombine.high %v493, %v493
    %v502 = vcombine.high %v500, %v500
    %v504 = vunpack.c.l.s4 1966171168
    %v505 = vunpack.c.0.s8 %v504
    %v506 = vlaneseq
    %v507 = vshrl.u32 %v506, 7
    %v508 = vsub.s32 %v505, %v507
    %v509 = vrot.slane %v493, %v508
    %v511 = vunpack.c.l.s4 1966171168
    %v512 = vunpack.c.0.s8 %v511
    %v513 = vlaneseq
    %v514 = vshrl.u32 %v513, 7
    %v515 = vsub.s32 %v512, %v514
    %v516 = vrot.slane %v500, %v515
    %v518 = vunpack.c.l.s4 1966171168
    %v519 = vunpack.c.0.s8 %v518
    %v520 = vlaneseq
    %v521 = vshrl.u32 %v520, 7
    %v522 = vsub.s32 %v519, %v521
    %v523 = vrot.slane %v501, %v522
    %v525 = vunpack.c.l.s4 1966171168
    %v526 = vunpack.c.0.s8 %v525
    %v527 = vlaneseq
    %v528 = vshrl.u32 %v527, 7
    %v529 = vsub.s32 %v526, %v528
    %v530 = vrot.slane %v502, %v529
    %v531 = vcombine.high %v509, %v509
    %v532 = vcombine.high %v516, %v516
    %v533 = vcombine.high %v523, %v523
    %v534 = vcombine.high %v530, %v530
    %v535 = vcombine.high %v255, %v255
    %v537 = vunpack.c.l.s4 1966171168
    %v538 = vunpack.c.0.s8 %v537
    %v539 = vlaneseq
    %v540 = vshrl.u32 %v539, 7
    %v541 = vsub.s32 %v538, %v540
    %v542 = vrot.slane %v255, %v541
    %v544 = vunpack.c.l.s4 1966171168
    %v545 = vunpack.c.0.s8 %v544
    %v546 = vlaneseq
    %v547 = vshrl.u32 %v546, 7
    %v548 = vsub.s32 %v545, %v547
    %v549 = vrot.slane %v535, %v548
    %v550 = vcombine.high %v542, %v542
    %v551 = vcombine.high %v549, %v549
    %v553 = vunpack.c.l.s4 1966171168
    %v554 = vunpack.c.0.s8 %v553
    %v555 = vlaneseq
    %v556 = vshrl.u32 %v555, 7
    %v557 = vsub.s32 %v554, %v556
    %v558 = vrot.slane %v542, %v557
    %v560 = vunpack.c.l.s4 1966171168
    %v561 = vunpack.c.0.s8 %v560
    %v562 = vlaneseq
    %v563 = vshrl.u32 %v562, 7
    %v564 = vsub.s32 %v561, %v563
    %v565 = vrot.slane %v549, %v564
    %v567 = vunpack.c.l.s4 1966171168
    %v568 = vunpack.c.0.s8 %v567
    %v569 = vlaneseq
    %v570 = vshrl.u32 %v569, 7
    %v571 = vsub.s32 %v568, %v570
    %v572 = vrot.slane %v550, %v571
    %v574 = vunpack.c.l.s4 1966171168
    %v575 = vunpack.c.0.s8 %v574
    %v576 = vlaneseq
    %v577 = vshrl.u32 %v576, 7
    %v578 = vsub.s32 %v575, %v577
    %v579 = vrot.slane %v551, %v578
    %v580 = vcombine.high %v558, %v558
    %v581 = vcombine.high %v565, %v565
    %v582 = vcombine.high %v572, %v572
    %v583 = vcombine.high %v579, %v579
    %v584 = vlaneseq
    %v585 = vshrl.u32 %v584, 7
    %v586 = vsub.s32 0, %v585
    %v587 = vrot.slane %v509, %v586
    %v588 = vlaneseq
    %v589 = vshrl.u32 %v588, 7
    %v590 = vsub.s32 0, %v589
    %v591 = vrot.slane %v523, %v590
    %v592 = vlaneseq
    %v593 = vshrl.u32 %v592, 7
    %v594 = vsub.s32 0, %v593
    %v595 = vrot.slane %v531, %v594
    %v596 = vlaneseq
    %v597 = vshrl.u32 %v596, 7
    %v598 = vsub.s32 0, %v597
    %v599 = vrot.slane %v533, %v598
    %v600 = vlaneseq
    %v601 = vshrl.u32 %v600, 7
    %v602 = vsub.s32 0, %v601
    %v603 = vrot.slane %v516, %v602
    %v604 = vlaneseq
    %v605 = vshrl.u32 %v604, 7
    %v606 = vsub.s32 0, %v605
    %v607 = vrot.slane %v530, %v606
    %v608 = vlaneseq
    %v609 = vshrl.u32 %v608, 7
    %v610 = vsub.s32 0, %v609
    %v611 = vrot.slane %v532, %v610
    %v612 = vlaneseq
    %v613 = vshrl.u32 %v612, 7
    %v614 = vsub.s32 0, %v613
    %v615 = vrot.slane %v534, %v614
    %v616 = vlaneseq
    %v617 = vshrl.u32 %v616, 7
    %v618 = vsub.s32 0, %v617
    %v619 = vrot.slane %v558, %v618
    %v620 = vlaneseq
    %v621 = vshrl.u32 %v620, 7
    %v622 = vsub.s32 0, %v621
    %v623 = vrot.slane %v572, %v622
    %v624 = vlaneseq
    %v625 = vshrl.u32 %v624, 7
    %v626 = vsub.s32 0, %v625
    %v627 = vrot.slane %v580, %v626
    %v628 = vlaneseq
    %v629 = vshrl.u32 %v628, 7
    %v630 = vsub.s32 0, %v629
    %v631 = vrot.slane %v582, %v630
    %v632 = vlaneseq
    %v633 = vshrl.u32 %v632, 7
    %v634 = vsub.s32 0, %v633
    %v635 = vrot.slane %v565, %v634
    %v636 = vlaneseq
    %v637 = vshrl.u32 %v636, 7
    %v638 = vsub.s32 0, %v637
    %v639 = vrot.slane %v579, %v638
    %v640 = vlaneseq
    %v641 = vshrl.u32 %v640, 7
    %v642 = vsub.s32 0, %v641
    %v643 = vrot.slane %v581, %v642
    %v644 = vlaneseq
    %v645 = vshrl.u32 %v644, 7
    %v646 = vsub.s32 0, %v645
    %v647 = vrot.slane %v583, %v646
    %648 = vset.pattern.permute.xlu0 0
    %649 = vperm.xlu0 %648, %v587
    %v650 = vpop.permute.xlu0 %649
    %652 = vset.pattern.permute.xlu0 0
    %653 = vperm.xlu0 %652, %v591
    %v654 = vpop.permute.xlu0 %653
    %656 = vset.pattern.permute.xlu0 0
    %657 = vperm.xlu0 %656, %v595
    %v658 = vpop.permute.xlu0 %657
    %660 = vset.pattern.permute.xlu0 0
    %661 = vperm.xlu0 %660, %v599
    %v662 = vpop.permute.xlu0 %661
    %664 = vset.pattern.permute.xlu0 0
    %665 = vperm.xlu0 %664, %v603
    %v666 = vpop.permute.xlu0 %665
    %668 = vset.pattern.permute.xlu0 0
    %669 = vperm.xlu0 %668, %v607
    %v670 = vpop.permute.xlu0 %669
    %672 = vset.pattern.permute.xlu0 0
    %673 = vperm.xlu0 %672, %v611
    %v674 = vpop.permute.xlu0 %673
    %676 = vset.pattern.permute.xlu0 0
    %677 = vperm.xlu0 %676, %v615
    %v678 = vpop.permute.xlu0 %677
    %680 = vset.pattern.permute.xlu0 0
    %681 = vperm.xlu0 %680, %v619
    %v682 = vpop.permute.xlu0 %681
    %684 = vset.pattern.permute.xlu0 0
    %685 = vperm.xlu0 %684, %v623
    %v686 = vpop.permute.xlu0 %685
    %688 = vset.pattern.permute.xlu0 0
    %689 = vperm.xlu0 %688, %v627
    %v690 = vpop.permute.xlu0 %689
    %692 = vset.pattern.permute.xlu0 0
    %693 = vperm.xlu0 %692, %v631
    %v694 = vpop.permute.xlu0 %693
    %696 = vset.pattern.permute.xlu0 0
    %697 = vperm.xlu0 %696, %v635
    %v698 = vpop.permute.xlu0 %697
    %700 = vset.pattern.permute.xlu0 0
    %701 = vperm.xlu0 %700, %v639
    %v702 = vpop.permute.xlu0 %701
    %704 = vset.pattern.permute.xlu0 0
    %705 = vperm.xlu0 %704, %v643
    %v706 = vpop.permute.xlu0 %705
    %708 = vset.pattern.permute.xlu0 0
    %709 = vperm.xlu0 %708, %v647
    %v710 = vpop.permute.xlu0 %709
    %v712 = vsel %vm468, %v650, 0.0
    %v713 = vsel %vm469, %v654, 0.0
    %v714 = vsel %vm470, %v658, 0.0
    %v715 = vsel %vm471, %v662, 0.0
    %v716 = vsel %vm472, %v666, 0.0
    %v717 = vsel %vm473, %v670, 0.0
    %v718 = vsel %vm474, %v674, 0.0
    %v719 = vsel %vm475, %v678, 0.0
    %v720 = vsel %vm476, %v682, 0.0
    %v721 = vsel %vm477, %v686, 0.0
    %v722 = vsel %vm478, %v690, 0.0
    %v723 = vsel %vm479, %v694, 0.0
    %v724 = vsel %vm480, %v698, 0.0
    %v725 = vsel %vm481, %v702, 0.0
    %v726 = vsel %vm482, %v706, 0.0
    %v727 = vsel %vm483, %v710, 0.0
    %v728 = vmul.f32 %v228, %v712
    %v729 = vmul.f32 %v229, %v713
    %v730 = vmul.f32 %v230, %v714
    %v731 = vmul.f32 %v231, %v715
    %v732 = vmul.f32 %v232, %v716
    %v733 = vmul.f32 %v233, %v717
    %v734 = vmul.f32 %v234, %v718
    %v735 = vmul.f32 %v235, %v719
    %v736 = vmul.f32 %v236, %v720
    %v737 = vmul.f32 %v237, %v721
    %v738 = vmul.f32 %v238, %v722
    %v739 = vmul.f32 %v239, %v723
    %v740 = vmul.f32 %v240, %v724
    %v741 = vmul.f32 %v241, %v725
    %v742 = vmul.f32 %v242, %v726
    %v743 = vmul.f32 %v243, %v727
    %v744 = vsel %vm62, %v728, 0.0
    %v745 = vrot.slane %v744, 4
    %v746 = vadd.f32 %v744, %v745
    %v747 = vrot.slane %v746, 2
    %v748 = vadd.f32 %v746, %v747
    %v749 = vrot.slane %v748, 1
    %v750 = vadd.f32 %v748, %v749
    %v751 = vsel %vm62, %v729, 0.0
    %v752 = vrot.slane %v751, 4
    %v753 = vadd.f32 %v751, %v752
    %v754 = vrot.slane %v753, 2
    %v755 = vadd.f32 %v753, %v754
    %v756 = vrot.slane %v755, 1
    %v757 = vadd.f32 %v755, %v756
    %v758 = vsel %vm62, %v730, 0.0
    %v759 = vrot.slane %v758, 4
    %v760 = vadd.f32 %v758, %v759
    %v761 = vrot.slane %v760, 2
    %v762 = vadd.f32 %v760, %v761
    %v763 = vrot.slane %v762, 1
    %v764 = vadd.f32 %v762, %v763
    %v765 = vsel %vm62, %v731, 0.0
    %v766 = vrot.slane %v765, 4
    %v767 = vadd.f32 %v765, %v766
    %v768 = vrot.slane %v767, 2
    %v769 = vadd.f32 %v767, %v768
    %v770 = vrot.slane %v769, 1
    %v771 = vadd.f32 %v769, %v770
    %v772 = vsel %vm62, %v732, 0.0
    %v773 = vrot.slane %v772, 4
    %v774 = vadd.f32 %v772, %v773
    %v775 = vrot.slane %v774, 2
    %v776 = vadd.f32 %v774, %v775
    %v777 = vrot.slane %v776, 1
    %v778 = vadd.f32 %v776, %v777
    %v779 = vsel %vm62, %v733, 0.0
    %v780 = vrot.slane %v779, 4
    %v781 = vadd.f32 %v779, %v780
    %v782 = vrot.slane %v781, 2
    %v783 = vadd.f32 %v781, %v782
    %v784 = vrot.slane %v783, 1
    %v785 = vadd.f32 %v783, %v784
    %v786 = vsel %vm62, %v734, 0.0
    %v787 = vrot.slane %v786, 4
    %v788 = vadd.f32 %v786, %v787
    %v789 = vrot.slane %v788, 2
    %v790 = vadd.f32 %v788, %v789
    %v791 = vrot.slane %v790, 1
    %v792 = vadd.f32 %v790, %v791
    %v793 = vsel %vm62, %v735, 0.0
    %v794 = vrot.slane %v793, 4
    %v795 = vadd.f32 %v793, %v794
    %v796 = vrot.slane %v795, 2
    %v797 = vadd.f32 %v795, %v796
    %v798 = vrot.slane %v797, 1
    %v799 = vadd.f32 %v797, %v798
    %v800 = vsel %vm62, %v736, 0.0
    %v801 = vrot.slane %v800, 4
    %v802 = vadd.f32 %v800, %v801
    %v803 = vrot.slane %v802, 2
    %v804 = vadd.f32 %v802, %v803
    %v805 = vrot.slane %v804, 1
    %v806 = vadd.f32 %v804, %v805
    %v807 = vsel %vm62, %v737, 0.0
    %v808 = vrot.slane %v807, 4
    %v809 = vadd.f32 %v807, %v808
    %v810 = vrot.slane %v809, 2
    %v811 = vadd.f32 %v809, %v810
    %v812 = vrot.slane %v811, 1
    %v813 = vadd.f32 %v811, %v812
    %v814 = vsel %vm62, %v738, 0.0
    %v815 = vrot.slane %v814, 4
    %v816 = vadd.f32 %v814, %v815
    %v817 = vrot.slane %v816, 2
    %v818 = vadd.f32 %v816, %v817
    %v819 = vrot.slane %v818, 1
    %v820 = vadd.f32 %v818, %v819
    %v821 = vsel %vm62, %v739, 0.0
    %v822 = vrot.slane %v821, 4
    %v823 = vadd.f32 %v821, %v822
    %v824 = vrot.slane %v823, 2
    %v825 = vadd.f32 %v823, %v824
    %v826 = vrot.slane %v825, 1
    %v827 = vadd.f32 %v825, %v826
    %v828 = vsel %vm62, %v740, 0.0
    %v829 = vrot.slane %v828, 4
    %v830 = vadd.f32 %v828, %v829
    %v831 = vrot.slane %v830, 2
    %v832 = vadd.f32 %v830, %v831
    %v833 = vrot.slane %v832, 1
    %v834 = vadd.f32 %v832, %v833
    %v835 = vsel %vm62, %v741, 0.0
    %v836 = vrot.slane %v835, 4
    %v837 = vadd.f32 %v835, %v836
    %v838 = vrot.slane %v837, 2
    %v839 = vadd.f32 %v837, %v838
    %v840 = vrot.slane %v839, 1
    %v841 = vadd.f32 %v839, %v840
    %v842 = vsel %vm62, %v742, 0.0
    %v843 = vrot.slane %v842, 4
    %v844 = vadd.f32 %v842, %v843
    %v845 = vrot.slane %v844, 2
    %v846 = vadd.f32 %v844, %v845
    %v847 = vrot.slane %v846, 1
    %v848 = vadd.f32 %v846, %v847
    %v849 = vsel %vm62, %v743, 0.0
    %v850 = vrot.slane %v849, 4
    %v851 = vadd.f32 %v849, %v850
    %v852 = vrot.slane %v851, 2
    %v853 = vadd.f32 %v851, %v852
    %v854 = vrot.slane %v853, 1
    %v855 = vadd.f32 %v853, %v854
    %v856 = vlaneseq
    %v857 = vshrl.u32 %v856, 7
    %v858 = vsub.s32 0, %v857
    %v859 = vrot.slane %v38, %v858
    %vm876 = vcmask 1041409
    %v877 = vsel %vm876, %v757, %v750
    %vm878 = vcmask 1042434
    %v879 = vsel %vm878, %v764, %v877
    %vm880 = vcmask 1043459
    %v881 = vsel %vm880, %v771, %v879
    %vm882 = vcmask 1044484
    %v883 = vsel %vm882, %v778, %v881
    %vm884 = vcmask 1045509
    %v885 = vsel %vm884, %v785, %v883
    %vm886 = vcmask 1046534
    %v887 = vsel %vm886, %v792, %v885
    %vm888 = vcmask 1047559
    %v889 = vsel %vm888, %v799, %v887
    %v890 = vsel %vm876, %v813, %v806
    %v891 = vsel %vm878, %v820, %v890
    %v892 = vsel %vm880, %v827, %v891
    %v893 = vsel %vm882, %v834, %v892
    %v894 = vsel %vm884, %v841, %v893
    %v895 = vsel %vm886, %v848, %v894
    %v896 = vsel %vm888, %v855, %v895
    %v897 = vsel %vm62, %v889, 0
    %v899 = vsel %vm62, %v896, 0
    %901 = vmatprep.subr.mxu0 0.0
    %902 = vmatpush1.msra.mxu0 %v33
    %903 = vmatprep.subr.mxu0 0.0
    %904 = vmatpush1.msra.mxu0 %v34
    %905 = vmatprep.subr.mxu0 0.0
    %906 = vmatpush1.msra.mxu0 %v35
    %907 = vmatprep.subr.mxu0 0.0
    %908 = vmatpush1.msra.mxu0 %v36
    %909 = vmatprep.subr.mxu0 0.0
    %910 = vmatpush1.msra.mxu0 0.0
    %911 = vmatprep.subr.mxu0 0.0
    %912 = vmatpush1.msra.mxu0 0.0
    %913 = vmatprep.subr.mxu0 0.0
    %914 = vmatpush1.msra.mxu0 0.0
    %915 = vmatprep.subr.mxu0 0.0
    %916 = vmatpush1.msra.mxu0 0.0
    %917 = vmatprep.subr.mxu0 0.0
    %918 = vmatpush1.msra.mxu0 0.0
    %919 = vmatprep.subr.mxu0 0.0
    %920 = vmatpush1.msra.mxu0 0.0
    %921 = vmatprep.subr.mxu0 0.0
    %922 = vmatpush1.msra.mxu0 0.0
    %923 = vmatprep.subr.mxu0 0.0
    %924 = vmatpush1.msra.mxu0 0.0
    %925 = vmatprep.subr.mxu0 0.0
    %926 = vmatpush1.msra.mxu0 0.0
    %927 = vmatprep.subr.mxu0 0.0
    %928 = vmatpush1.msra.mxu0 0.0
    %929 = vmatprep.subr.mxu0 0.0
    %930 = vmatpush1.msra.mxu0 0.0
    %931 = vmatprep.subr.mxu0 0.0
    %932 = vmatpush1.msra.mxu0 0.0
    %933 = vmatprep.subr.mxu0 0.0
    %934 = vmatpush1.msra.mxu0 0.0
    %935 = vmatprep.subr.mxu0 0.0
    %936 = vmatpush1.msra.mxu0 0.0
    %937 = vmatprep.subr.mxu0 0.0
    %938 = vmatpush1.msra.mxu0 0.0
    %939 = vmatprep.subr.mxu0 0.0
    %940 = vmatpush1.msra.mxu0 0.0
    %941 = vmatprep.subr.mxu0 0.0
    %942 = vmatpush1.msra.mxu0 0.0
    %943 = vmatprep.subr.mxu0 0.0
    %944 = vmatpush1.msra.mxu0 0.0
    %945 = vmatprep.subr.mxu0 0.0
    %946 = vmatpush1.msra.mxu0 0.0
    %947 = vmatprep.subr.mxu0 0.0
    %948 = vmatpush1.msra.mxu0 0.0
    %949 = vmatprep.subr.mxu0 0.0
    %950 = vmatpush1.msra.mxu0 0.0
    %951 = vmatprep.subr.mxu0 0.0
    %952 = vmatpush1.msra.mxu0 0.0
    %953 = vmatprep.subr.mxu0 0.0
    %954 = vmatpush1.msra.mxu0 0.0
    %955 = vmatprep.subr.mxu0 0.0
    %956 = vmatpush1.msra.mxu0 0.0
    %957 = vmatprep.subr.mxu0 0.0
    %958 = vmatpush1.msra.mxu0 0.0
    %959 = vmatprep.subr.mxu0 0.0
    %960 = vmatpush1.msra.mxu0 0.0
    %961 = vmatprep.subr.mxu0 0.0
    %962 = vmatpush1.msra.mxu0 0.0
    %963 = vmatprep.subr.mxu0 0.0
    %964 = vmatpush1.msra.mxu0 0.0
    %965 = vmatprep.mubr.f32.mxu0 0.0
    %966 = vmatmul.mubr.f32.gmra.mrb[0].mxu0 %v897
    %v967 = vpop.f32.mrb[0].mxu0
    %v968 = vadd.f32 %v859, %v967
    %v969 = vpop.f32.mrb[0].mxu0
    %970 = vmatprep.mubr.f32.mxu0 0.0
    %971 = vmatmul.mubr.f32.gmra.mrb[0].mxu0 %v899
    %v972 = vpop.f32.mrb[0].mxu0
    %v973 = vadd.f32 %v859, %v972
    %v974 = vpop.f32.mrb[0].mxu0
    %975 = vdwg.mxu0
    %v976 = vmax.f32 %v968, 0.0
    %v977 = vmax.f32 %v973, 0.0
    %v979 = vsel %vm146, %v976, 0
    %v982 = vsel %vm146, %v977, 0
    %984 = vmatprep.subr.mxu0 0.0
    %985 = vmatpush1.msra.mxu0 %v47
    %986 = vmatprep.subr.mxu0 0.0
    %987 = vmatpush1.msra.mxu0 %v48
    %988 = vmatprep.subr.mxu0 0.0
    %989 = vmatpush1.msra.mxu0 %v49
    %990 = vmatprep.subr.mxu0 0.0
    %991 = vmatpush1.msra.mxu0 %v50
    %992 = vmatprep.subr.mxu0 0.0
    %993 = vmatpush1.msra.mxu0 %v51
    %994 = vmatprep.subr.mxu0 0.0
    %995 = vmatpush1.msra.mxu0 %v52
    %996 = vmatprep.subr.mxu0 0.0
    %997 = vmatpush1.msra.mxu0 %v53
    %998 = vmatprep.subr.mxu0 0.0
    %999 = vmatpush1.msra.mxu0 %v54
    %1000 = vmatprep.subr.mxu0 0.0
    %1001 = vmatpush1.msra.mxu0 0.0
    %1002 = vmatprep.subr.mxu0 0.0
    %1003 = vmatpush1.msra.mxu0 0.0
    %1004 = vmatprep.subr.mxu0 0.0
    %1005 = vmatpush1.msra.mxu0 0.0
    %1006 = vmatprep.subr.mxu0 0.0
    %1007 = vmatpush1.msra.mxu0 0.0
    %1008 = vmatprep.subr.mxu0 0.0
    %1009 = vmatpush1.msra.mxu0 0.0
    %1010 = vmatprep.subr.mxu0 0.0
    %1011 = vmatpush1.msra.mxu0 0.0
    %1012 = vmatprep.subr.mxu0 0.0
    %1013 = vmatpush1.msra.mxu0 0.0
    %1014 = vmatprep.subr.mxu0 0.0
    %1015 = vmatpush1.msra.mxu0 0.0
    %1016 = vmatprep.subr.mxu0 0.0
    %1017 = vmatpush1.msra.mxu0 0.0
    %1018 = vmatprep.subr.mxu0 0.0
    %1019 = vmatpush1.msra.mxu0 0.0
    %1020 = vmatprep.subr.mxu0 0.0
    %1021 = vmatpush1.msra.mxu0 0.0
    %1022 = vmatprep.subr.mxu0 0.0
    %1023 = vmatpush1.msra.mxu0 0.0
    %1024 = vmatprep.subr.mxu0 0.0
    %1025 = vmatpush1.msra.mxu0 0.0
    %1026 = vmatprep.subr.mxu0 0.0
    %1027 = vmatpush1.msra.mxu0 0.0
    %1028 = vmatprep.subr.mxu0 0.0
    %1029 = vmatpush1.msra.mxu0 0.0
    %1030 = vmatprep.subr.mxu0 0.0
    %1031 = vmatpush1.msra.mxu0 0.0
    %1032 = vmatprep.subr.mxu0 0.0
    %1033 = vmatpush1.msra.mxu0 0.0
    %1034 = vmatprep.subr.mxu0 0.0
    %1035 = vmatpush1.msra.mxu0 0.0
    %1036 = vmatprep.subr.mxu0 0.0
    %1037 = vmatpush1.msra.mxu0 0.0
    %1038 = vmatprep.subr.mxu0 0.0
    %1039 = vmatpush1.msra.mxu0 0.0
    %1040 = vmatprep.subr.mxu0 0.0
    %1041 = vmatpush1.msra.mxu0 0.0
    %1042 = vmatprep.subr.mxu0 0.0
    %1043 = vmatpush1.msra.mxu0 0.0
    %1044 = vmatprep.subr.mxu0 0.0
    %1045 = vmatpush1.msra.mxu0 0.0
    %1046 = vmatprep.subr.mxu0 0.0
    %1047 = vmatpush1.msra.mxu0 0.0
    %1048 = vmatprep.mubr.f32.mxu0 0.0
    %1049 = vmatmul.mubr.f32.gmra.mrb[0].mxu0 %v979
    %v1050 = vpop.f32.mrb[0].mxu0
    %v1051 = vadd.f32 0.0, %v1050
    %v1052 = vpop.f32.mrb[0].mxu0
    %1053 = vmatprep.mubr.f32.mxu0 0.0
    %1054 = vmatmul.mubr.f32.gmra.mrb[0].mxu0 %v982
    %v1055 = vpop.f32.mrb[0].mxu0
    %v1056 = vadd.f32 0.0, %v1055
    %v1057 = vpop.f32.mrb[0].mxu0
    %1058 = vdwg.mxu0
    %v1060 = vsel %vm146, %v220, 0
    %v1063 = vsel %vm146, %v225, 0
    %1065 = vmatprep.subr.mxu0 0.0
    %1066 = vmatpush1.msra.mxu0 %v39
    %1067 = vmatprep.subr.mxu0 0.0
    %1068 = vmatpush1.msra.mxu0 %v40
    %1069 = vmatprep.subr.mxu0 0.0
    %1070 = vmatpush1.msra.mxu0 %v41
    %1071 = vmatprep.subr.mxu0 0.0
    %1072 = vmatpush1.msra.mxu0 %v42
    %1073 = vmatprep.subr.mxu0 0.0
    %1074 = vmatpush1.msra.mxu0 %v43
    %1075 = vmatprep.subr.mxu0 0.0
    %1076 = vmatpush1.msra.mxu0 %v44
    %1077 = vmatprep.subr.mxu0 0.0
    %1078 = vmatpush1.msra.mxu0 %v45
    %1079 = vmatprep.subr.mxu0 0.0
    %1080 = vmatpush1.msra.mxu0 %v46
    %1081 = vmatprep.subr.mxu0 0.0
    %1082 = vmatpush1.msra.mxu0 0.0
    %1083 = vmatprep.subr.mxu0 0.0
    %1084 = vmatpush1.msra.mxu0 0.0
    %1085 = vmatprep.subr.mxu0 0.0
    %1086 = vmatpush1.msra.mxu0 0.0
    %1087 = vmatprep.subr.mxu0 0.0
    %1088 = vmatpush1.msra.mxu0 0.0
    %1089 = vmatprep.subr.mxu0 0.0
    %1090 = vmatpush1.msra.mxu0 0.0
    %1091 = vmatprep.subr.mxu0 0.0
    %1092 = vmatpush1.msra.mxu0 0.0
    %1093 = vmatprep.subr.mxu0 0.0
    %1094 = vmatpush1.msra.mxu0 0.0
    %1095 = vmatprep.subr.mxu0 0.0
    %1096 = vmatpush1.msra.mxu0 0.0
    %1097 = vmatprep.subr.mxu0 0.0
    %1098 = vmatpush1.msra.mxu0 0.0
    %1099 = vmatprep.subr.mxu0 0.0
    %1100 = vmatpush1.msra.mxu0 0.0
    %1101 = vmatprep.subr.mxu0 0.0
    %1102 = vmatpush1.msra.mxu0 0.0
    %1103 = vmatprep.subr.mxu0 0.0
    %1104 = vmatpush1.msra.mxu0 0.0
    %1105 = vmatprep.subr.mxu0 0.0
    %1106 = vmatpush1.msra.mxu0 0.0
    %1107 = vmatprep.subr.mxu0 0.0
    %1108 = vmatpush1.msra.mxu0 0.0
    %1109 = vmatprep.subr.mxu0 0.0
    %1110 = vmatpush1.msra.mxu0 0.0
    %1111 = vmatprep.subr.mxu0 0.0
    %1112 = vmatpush1.msra.mxu0 0.0
    %1113 = vmatprep.subr.mxu0 0.0
    %1114 = vmatpush1.msra.mxu0 0.0
    %1115 = vmatprep.subr.mxu0 0.0
    %1116 = vmatpush1.msra.mxu0 0.0
    %1117 = vmatprep.subr.mxu0 0.0
    %1118 = vmatpush1.msra.mxu0 0.0
    %1119 = vmatprep.subr.mxu0 0.0
    %1120 = vmatpush1.msra.mxu0 0.0
    %1121 = vmatprep.subr.mxu0 0.0
    %1122 = vmatpush1.msra.mxu0 0.0
    %1123 = vmatprep.subr.mxu0 0.0
    %1124 = vmatpush1.msra.mxu0 0.0
    %1125 = vmatprep.subr.mxu0 0.0
    %1126 = vmatpush1.msra.mxu0 0.0
    %1127 = vmatprep.subr.mxu0 0.0
    %1128 = vmatpush1.msra.mxu0 0.0
    %1129 = vmatprep.mubr.f32.mxu0 0.0
    %1130 = vmatmul.mubr.f32.gmra.mrb[0].mxu0 %v1060
    %v1131 = vpop.f32.mrb[0].mxu0
    %v1132 = vadd.f32 %v1051, %v1131
    %v1133 = vpop.f32.mrb[0].mxu0
    %1134 = vmatprep.mubr.f32.mxu0 0.0
    %1135 = vmatmul.mubr.f32.gmra.mrb[0].mxu0 %v1063
    %v1136 = vpop.f32.mrb[0].mxu0
    %v1137 = vadd.f32 %v1056, %v1136
    %v1138 = vpop.f32.mrb[0].mxu0
    %1139 = vdwg.mxu0
    %v1140 = vlaneseq
    %v1141 = vshrl.u32 %v1140, 7
    %v1142 = vsub.s32 0, %v1141
    %v1143 = vrot.slane %v55, %v1142
    %v1144 = vadd.f32 %v1132, %v1143
    %v1145 = vadd.f32 %v1137, %v1143
    %1146 = vst [vmem:[#allocation2] sm:$0xff] %v1144
    %1147 = vst [vmem:[#allocation2 + $0x8] sm:$0xff] %v1145
    // Predicated region
    $region22: #{tpu_custom_call.1} parent=1 // pred_check
      _
    $region23: #{tpu_custom_call.1} parent=1 // pred_check_branch
      %1149 = sbr.rel (0) target = $region25
    $region24: #{tpu_custom_call.1} parent=1 // pred_region
      %s1151 = ssub.s32 256, 256
      %1152 = vsyncadd [#allocation3], %s1151
      %s1153 = sshll.u32 [#allocation2], 4
      %s1154 = int_to_ptr.vmem [resolvable:$true] %s1153
      %1159 = dma.vmem_to_hbm [thread:$0]  %s1154, 256, %s5, [#allocation3], 128, 128, 8
    $region25: #{tpu_custom_call.1} parent=1 // pred_fallthru
      _
    // Predicated region
    $region26: #{tpu_custom_call.1} parent=1 // pred_check
      _
    $region27: #{tpu_custom_call.1} parent=1 // pred_check_branch
      %1161 = sbr.rel (0) target = $region29
    $region28: #{tpu_custom_call.1} parent=1 // pred_region
      %1162 = dma.done [#allocation3], 256
    $region29: #{tpu_custom_call.1} parent=1 // pred_fallthru
      _
    %1163 = vsyncpa [#allocation3], 1

</llo_original>
